<compile_context>
chip_gen: v7x
topology: tpu7x:2x2x1
jax: 0.10.0
libtpu: 0.0.40
codegen_flags: <defaults>
</compile_context>

<pallas_src>
import math
import jax
import jax.numpy as jnp
from jax.experimental import pallas as pl
from jax.experimental.pallas import tpu as pltpu


def lstm_recurrence_kernel(gates_x_ref, whh_ref, bias_ref, valid_ref, h_out_ref,
                           h_scr, c_scr):
    """One (batch-block, time-block) grid step of the sequential LSTM recurrence.

    gates_x_ref: (Tb, Bb, 4H)  precomputed x @ W_ih^T (time-major, f32 or bf16)
    whh_ref:     (H, 4H)       W_hh^T
    bias_ref:    (1, 4H)       b_ih + b_hh, f32 (added in-kernel so gates_x can be bf16)
    valid_ref:   (Tb, Bb, 1)   prefix pad mask, f32
    h_out_ref:   (Tb, Bb, H)   masked hidden states
    h_scr/c_scr: (Bb, H) f32   carry across time blocks (VMEM scratch)
    """
    t_blk = pl.program_id(1)

    @pl.when(t_blk == 0)
    def _():
        h_scr[...] = jnp.zeros_like(h_scr)
        c_scr[...] = jnp.zeros_like(c_scr)

    Tb, Bb, G4 = gates_x_ref.shape
    H = G4 // 4

    whh = whh_ref[...]                             # loaded once per block, reused all steps
    bias = bias_ref[...].astype(jnp.float32)       # (1, 4H)

    # Lane mask selecting the tanh ('g') gate segment (PyTorch gate order: i, f, g, o).
    # Hoisted out of the loop (JAX does not CSE broadcasts).
    lane = jax.lax.broadcasted_iota(jnp.int32, (Bb, G4), 1)
    is_g = jnp.logical_and(lane >= 2 * H, lane < 3 * H)

    def step(t, carry):
        h, c = carry
        # Per-step critical path: small (Bb,H)x(H,4H) hh matmul + gate math.
        gates = (gates_x_ref[t].astype(jnp.float32) + bias
                 + jnp.dot(h.astype(whh.dtype), whh,
                           preferred_element_type=jnp.float32))        # (Bb, 4H) f32
        # One-tanh trick: sigmoid(x) = 0.5*tanh(x/2) + 0.5, so a SINGLE tanh over the
        # whole tile covers all four gates (EUP work cut ~1.8x vs tanh+sigmoid on 4H).
        pre = jnp.where(is_g, gates, gates * 0.5)
        th = jnp.tanh(pre)
        act = jnp.where(is_g, th, 0.5 * th + 0.5)
        i_g = act[:, 0 * H:1 * H]
        f_g = act[:, 1 * H:2 * H]
        g_g = act[:, 2 * H:3 * H]
        o_g = act[:, 3 * H:4 * H]
        c_new = f_g * c + i_g * g_g
        h_new = o_g * jnp.tanh(c_new)
        # Pad mask folded into the store; the carry stays unmasked (prefix mask => exact).
        h_out_ref[t] = (h_new * valid_ref[t]).astype(h_out_ref.dtype)
        return h_new, c_new

    # Capped unroll: cross-iteration scheduling visibility without vreg spills.
    h_fin, c_fin = jax.lax.fori_loop(0, Tb, step, (h_scr[...], c_scr[...]), unroll=4)
    h_scr[...] = h_fin
    c_scr[...] = c_fin


def _largest_divisor(n, cap):
    for d in range(max(1, min(n, cap)), 0, -1):
        if n % d == 0:
            return d
    return 1


def _padded_vmem_bytes(shape, dtype):
    """Conservative VMEM bytes for one buffer (last two dims padded to (8,128))."""
    s = list(shape)
    s[-1] = -(-s[-1] // 128) * 128
    if len(s) >= 2:
        s[-2] = -(-s[-2] // 8) * 8
    n = 1
    for d in s:
        n *= d
    return n * jnp.dtype(dtype).itemsize


def rnn_layers_forward(data, non_pad_mask, params, *,
                       mxu_dtype=jnp.bfloat16, time_block=16):
    """data: (B, T, d_model) f32, non_pad_mask: (B, T, 1) -> (B, T, d_model).

    mxu_dtype: GEMM-operand / gates_x / h_out dtype (bf16 = production default;
               f32 = exact check).  Gate math and c/h state are always f32.
    time_block: target timesteps per grid step (largest divisor of T <= this is used).
    """
    w_ih, w_hh, b_ih, b_hh, w_proj, b_proj = params
    B, T, D = data.shape
    H = w_hh.shape[1]
    G4 = 4 * H
    exact = jnp.dtype(mxu_dtype) == jnp.dtype(jnp.float32)
    gx_dtype = jnp.float32 if exact else jnp.dtype(mxu_dtype)

    # Prefix-valid mask (pack_padded_sequence semantics: mask assumed prefix-contiguous).
    lengths = jnp.sum(non_pad_mask[:, :, 0].astype(jnp.int32), axis=1)            # (B,)
    valid = (jnp.arange(T)[:, None] < lengths[None, :]).astype(jnp.float32)[:, :, None]  # (T,B,1)

    # (1) Input projection hoisted out of the recurrence: one big GEMM over all T*B
    #     rows; the (B,T)->(T,B) transpose is folded into the einsum output layout.
    gates_x = jnp.einsum(
        'btd,gd->tbg', data.astype(mxu_dtype), w_ih.astype(mxu_dtype),
        preferred_element_type=jnp.float32).astype(gx_dtype)                      # (T, B, 4H)
    bias = (b_ih + b_hh).astype(jnp.float32).reshape(1, G4)                       # added in-kernel (f32)
    whh_t = jnp.transpose(w_hh).astype(mxu_dtype)                                 # (H, 4H)

    # Time / batch blocking.  NOTE: for MXU / lane efficiency, production shapes want
    # B a multiple of 8 (16 for bf16) and H a multiple of 128; batch independent
    # sequences into B if the model's are smaller.
    Tb = _largest_divisor(T, time_block)
    nt = T // Tb
    nb = 2 if (B % 2 == 0 and (B // 2) % 8 == 0) else 1        # 2 TCs on v7x, sublane-aligned
    Bb = B // nb

    # Scoped-VMEM limit sized to actual per-block use (double buffers) + headroom.
    vmem_need = (
        2 * (_padded_vmem_bytes((Tb, Bb, G4), gx_dtype)          # gates_x block
             + _padded_vmem_bytes((Tb, Bb, H), gx_dtype)         # h_out block
             + _padded_vmem_bytes((Tb, Bb, 1), jnp.float32)      # valid block
             + _padded_vmem_bytes((H, G4), mxu_dtype)            # W_hh^T
             + _padded_vmem_bytes((1, G4), jnp.float32))         # bias
        + 2 * _padded_vmem_bytes((Bb, H), jnp.float32))          # h/c scratch
    vmem_limit = int(min(max(2 * vmem_need + (4 << 20), 16 << 20), 64 << 20))

    grid_spec = pltpu.PrefetchScalarGridSpec(
        num_scalar_prefetch=0,
        grid=(nb, nt),
        in_specs=[
            pl.BlockSpec((Tb, Bb, G4), lambda b, t: (t, b, 0)),   # gates_x (streamed)
            pl.BlockSpec((H, G4),      lambda b, t: (0, 0)),      # W_hh^T (resident)
            pl.BlockSpec((1, G4),      lambda b, t: (0, 0)),      # bias   (resident)
            pl.BlockSpec((Tb, Bb, 1),  lambda b, t: (t, b, 0)),   # pad mask (streamed)
        ],
        out_specs=pl.BlockSpec((Tb, Bb, H), lambda b, t: (t, b, 0)),
        scratch_shapes=[pltpu.VMEM((Bb, H), jnp.float32),         # h carry
                        pltpu.VMEM((Bb, H), jnp.float32)],        # c carry
    )

    h_all = pl.pallas_call(
        lstm_recurrence_kernel,
        out_shape=jax.ShapeDtypeStruct((T, B, H), gx_dtype),
        grid_spec=grid_spec,
        compiler_params=pltpu.CompilerParams(
            dimension_semantics=("parallel", "arbitrary"),
            vmem_limit_bytes=vmem_limit),
    )(gates_x, whh_t, bias, valid)

    # (2) Output Linear as one batched, lane-dense GEMM; the time-major -> batch-major
    #     transpose is folded into the einsum.  Padded rows were zeroed in-kernel, so
    #     they project to exactly the bias (matches pad_packed_sequence + Linear).
    out = jnp.einsum(
        'tbh,dh->btd', h_all.astype(mxu_dtype), w_proj.astype(mxu_dtype),
        preferred_element_type=jnp.float32) + b_proj                              # (B, T, Dm)
    return out.astype(data.dtype)
    # TODO(synk): torch's pad_packed_sequence trims the time axis to max(lengths);
    # here the full T is kept (identical when any sequence is full-length).


def rnn_layers_reference(data, non_pad_mask, params):
    """Pure-JAX reference mirroring the PyTorch module."""
    w_ih, w_hh, b_ih, b_hh, w_proj, b_proj = params
    B, T, D = data.shape
    H = w_hh.shape[1]
    lengths = jnp.sum(non_pad_mask[:, :, 0].astype(jnp.int32), axis=1)

    def step(carry, x_t):
        h, c = carry
        gates = x_t @ w_ih.T + h @ w_hh.T + b_ih + b_hh
        i = jax.nn.sigmoid(gates[:, 0 * H:1 * H])
        f = jax.nn.sigmoid(gates[:, 1 * H:2 * H])
        g = jnp.tanh(gates[:, 2 * H:3 * H])
        o = jax.nn.sigmoid(gates[:, 3 * H:4 * H])
        c = f * c + i * g
        h = o * jnp.tanh(c)
        return (h, c), h

    x_tm = jnp.transpose(data, (1, 0, 2))
    _, hs = jax.lax.scan(step, (jnp.zeros((B, H)), jnp.zeros((B, H))), x_tm)
    hs = jnp.transpose(hs, (1, 0, 2))                                             # (B, T, H)
    valid = (jnp.arange(T)[None, :] < lengths[:, None]).astype(data.dtype)[:, :, None]
    hs = hs * valid
    return hs @ w_proj.T + b_proj


def init_params(key, d_model, d_rnn):
    """Deterministic init matching PyTorch parameter shapes (not a checkpoint)."""
    k = jax.random.split(key, 6)
    s_lstm = 1.0 / math.sqrt(d_rnn)
    s_lin = 1.0 / math.sqrt(d_rnn)
    w_ih = jax.random.uniform(k[0], (4 * d_rnn, d_model), jnp.float32, -s_lstm, s_lstm)
    w_hh = jax.random.uniform(k[1], (4 * d_rnn, d_rnn), jnp.float32, -s_lstm, s_lstm)
    b_ih = jax.random.uniform(k[2], (4 * d_rnn,), jnp.float32, -s_lstm, s_lstm)
    b_hh = jax.random.uniform(k[3], (4 * d_rnn,), jnp.float32, -s_lstm, s_lstm)
    w_proj = jax.random.uniform(k[4], (d_model, d_rnn), jnp.float32, -s_lin, s_lin)
    b_proj = jax.random.uniform(k[5], (d_model,), jnp.float32, -s_lin, s_lin)
    return (w_ih, w_hh, b_ih, b_hh, w_proj, b_proj)


if __name__ == "__main__":
    B, T, d_model, d_rnn = 2, 8, 32, 32

    key = jax.random.PRNGKey(0)
    k_data, k_param = jax.random.split(key)

    data = jax.random.normal(k_data, (B, T, d_model), jnp.float32)
    # prefix-valid mask; one full-length sequence so pad_packed width == T
    lengths = jnp.array([T, 5], dtype=jnp.int32)
    non_pad_mask = (jnp.arange(T)[None, :] < lengths[:, None]).astype(jnp.float32)[:, :, None]

    params = init_params(k_param, d_model, d_rnn)
    ref = rnn_layers_reference(data, non_pad_mask, params)

    # Exact-check path: f32 GEMMs, time_block=4 -> 2 time blocks exercising the h/c carry.
    out_f32 = jax.block_until_ready(
        rnn_layers_forward(data, non_pad_mask, params,
                           mxu_dtype=jnp.float32, time_block=4))
    assert out_f32.shape == (B, T, d_model)
    assert jnp.allclose(out_f32, ref, atol=1e-3, rtol=1e-3), \
        float(jnp.max(jnp.abs(out_f32 - ref)))

    # Production path: bf16 MXU operands / gates_x / h_out, f32 gate math and state.
    out_bf16 = jax.block_until_ready(
        rnn_layers_forward(data, non_pad_mask, params,
                           mxu_dtype=jnp.bfloat16, time_block=4))
    assert jnp.allclose(out_bf16, ref, atol=6e-2, rtol=6e-2), \
        float(jnp.max(jnp.abs(out_bf16 - ref)))

    print("KERNEL_OK")
</pallas_src>

<mosaic_0001>
module attributes {stable_mosaic.version = 11 : i64} {
  func.func @lstm_recurrence_kernel(%arg0: i32, %arg1: i32, %arg2: memref<4x2x128xf32, #tpu.memory_space<vmem>>, %arg3: memref<32x128xf32, #tpu.memory_space<vmem>>, %arg4: memref<1x128xf32, #tpu.memory_space<vmem>>, %arg5: memref<4x2x1xf32, #tpu.memory_space<vmem>>, %arg6: memref<4x2x32xf32, #tpu.memory_space<vmem>>, %arg7: memref<2x32xf32, #tpu.memory_space<vmem>>, %arg8: memref<2x32xf32, #tpu.memory_space<vmem>>) attributes {dimension_semantics = [#tpu.dimension_semantics<parallel>, #tpu.dimension_semantics<arbitrary>], iteration_bounds = array<i64: 1, 2>, scalar_prefetch = 0 : i64, scratch_operands = 2 : i64, tpu.core_type = #tpu.core_type<tc>, window_params = [{transform_indices = @transform_0, window_bounds = array<i64: 4, 2, 128>}, {pipeline_mode = #tpu.pipeline_mode<synchronous>, transform_indices = @transform_1, window_bounds = array<i64: 32, 128>}, {pipeline_mode = #tpu.pipeline_mode<synchronous>, transform_indices = @transform_2, window_bounds = array<i64: 1, 128>}, {transform_indices = @transform_3, window_bounds = array<i64: 4, 2, 1>}, {transform_indices = @transform_4, window_bounds = array<i64: 4, 2, 32>}]} {
    %c0_i32 = arith.constant 0 : i32
    %0 = arith.cmpi eq, %arg1, %c0_i32 : i32
    %1 = arith.extui %0 : i1 to i32
    %c0_i32_0 = arith.constant 0 : i32
    %2 = arith.cmpi ne, %1, %c0_i32_0 : i32
    scf.if %2 {
      %cst_52 = arith.constant 0.000000e+00 : f32
      %151 = vector.broadcast %cst_52 : f32 to vector<2x32xf32>
      %c0_53 = arith.constant 0 : index
      %c0_54 = arith.constant 0 : index
      %152 = vector.load %arg7[%c0_53, %c0_54] : memref<2x32xf32, #tpu.memory_space<vmem>>, vector<2x32xf32>
      tpu.vector_store %arg7[%c0_53, %c0_54], %151 {strides = array<i32>} : memref<2x32xf32, #tpu.memory_space<vmem>>, vector<2x32xf32>,
      %cst_55 = arith.constant 0.000000e+00 : f32
      %153 = vector.broadcast %cst_55 : f32 to vector<2x32xf32>
      %c0_56 = arith.constant 0 : index
      %c0_57 = arith.constant 0 : index
      %154 = vector.load %arg8[%c0_56, %c0_57] : memref<2x32xf32, #tpu.memory_space<vmem>>, vector<2x32xf32>
      tpu.vector_store %arg8[%c0_56, %c0_57], %153 {strides = array<i32>} : memref<2x32xf32, #tpu.memory_space<vmem>>, vector<2x32xf32>,
    } else {
    }
    %c0 = arith.constant 0 : index
    %c0_1 = arith.constant 0 : index
    %3 = vector.load %arg3[%c0, %c0_1] : memref<32x128xf32, #tpu.memory_space<vmem>>, vector<32x128xf32>
    %c0_2 = arith.constant 0 : index
    %c0_3 = arith.constant 0 : index
    %4 = vector.load %arg4[%c0_2, %c0_3] : memref<1x128xf32, #tpu.memory_space<vmem>>, vector<1x128xf32>
    %5 = tpu.iota {dimensions = array<i32: 1>} : vector<2x128xi32>
    %c64_i32 = arith.constant 64 : i32
    %6 = vector.broadcast %c64_i32 : i32 to vector<2x128xi32>
    %7 = arith.cmpi sge, %5, %6 : vector<2x128xi32>
    %c96_i32 = arith.constant 96 : i32
    %8 = vector.broadcast %c96_i32 : i32 to vector<2x128xi32>
    %9 = arith.cmpi slt, %5, %8 : vector<2x128xi32>
    %10 = arith.andi %7, %9 : vector<2x128xi1>
    %c0_4 = arith.constant 0 : index
    %c0_5 = arith.constant 0 : index
    %11 = vector.load %arg7[%c0_4, %c0_5] : memref<2x32xf32, #tpu.memory_space<vmem>>, vector<2x32xf32>
    %c0_6 = arith.constant 0 : index
    %c0_7 = arith.constant 0 : index
    %12 = vector.load %arg8[%c0_6, %c0_7] : memref<2x32xf32, #tpu.memory_space<vmem>>, vector<2x32xf32>
    %c0_i32_8 = arith.constant 0 : i32
    %13 = arith.index_cast %c0_i32_8 : i32 to index
    %c0_9 = arith.constant 0 : index
    %c0_10 = arith.constant 0 : index
    %14 = vector.load %arg2[%13, %c0_9, %c0_10] : memref<4x2x128xf32, #tpu.memory_space<vmem>>, vector<1x2x128xf32>
    %15 = vector.shape_cast %14 : vector<1x2x128xf32> to vector<2x128xf32>
    %16 = vector.broadcast %4 : vector<1x128xf32> to vector<2x128xf32>
    %17 = arith.addf %15, %16 : vector<2x128xf32>
    %cst = arith.constant dense<0.000000e+00> : vector<2x128xf32>
    %18 = tpu.matmul %11, %3, %cst {dimension_numbers = #tpu.dot_dimension_numbers<[1], [0], [0], [1], [0, 0, 1, 1], [], []>} : vector<2x32xf32>, vector<32x128xf32>, vector<2x128xf32> -> vector<2x128xf32>
    %19 = arith.addf %17, %18 : vector<2x128xf32>
    %cst_11 = arith.constant 5.000000e-01 : f32
    %20 = vector.broadcast %cst_11 : f32 to vector<2x128xf32>
    %21 = arith.mulf %19, %20 : vector<2x128xf32>
    %22 = arith.select %10, %19, %21 : vector<2x128xi1>, vector<2x128xf32>
    %23 = math.tanh %22 : vector<2x128xf32>
    %cst_12 = arith.constant 5.000000e-01 : f32
    %24 = vector.broadcast %cst_12 : f32 to vector<2x128xf32>
    %25 = arith.mulf %24, %23 : vector<2x128xf32>
    %cst_13 = arith.constant 5.000000e-01 : f32
    %26 = vector.broadcast %cst_13 : f32 to vector<2x128xf32>
    %27 = arith.addf %25, %26 : vector<2x128xf32>
    %28 = arith.select %10, %23, %27 : vector<2x128xi1>, vector<2x128xf32>
    %29 = vector.extract_strided_slice %28 {offsets = [0, 0], sizes = [2, 32], strides = [1, 1]} : vector<2x128xf32> to vector<2x32xf32>
    %30 = vector.extract_strided_slice %28 {offsets = [0, 32], sizes = [2, 32], strides = [1, 1]} : vector<2x128xf32> to vector<2x32xf32>
    %31 = vector.extract_strided_slice %28 {offsets = [0, 64], sizes = [2, 32], strides = [1, 1]} : vector<2x128xf32> to vector<2x32xf32>
    %32 = vector.extract_strided_slice %28 {offsets = [0, 96], sizes = [2, 32], strides = [1, 1]} : vector<2x128xf32> to vector<2x32xf32>
    %33 = arith.mulf %30, %12 : vector<2x32xf32>
    %34 = arith.mulf %29, %31 : vector<2x32xf32>
    %35 = arith.addf %33, %34 : vector<2x32xf32>
    %36 = math.tanh %35 : vector<2x32xf32>
    %37 = arith.mulf %32, %36 : vector<2x32xf32>
    %38 = arith.index_cast %c0_i32_8 : i32 to index
    %c0_14 = arith.constant 0 : index
    %c0_15 = arith.constant 0 : index
    %39 = vector.load %arg5[%38, %c0_14, %c0_15] : memref<4x2x1xf32, #tpu.memory_space<vmem>>, vector<1x2x1xf32>
    %40 = vector.shape_cast %39 : vector<1x2x1xf32> to vector<2x1xf32>
    %41 = vector.broadcast %40 : vector<2x1xf32> to vector<2x32xf32>
    %42 = arith.mulf %37, %41 : vector<2x32xf32>
    %43 = arith.index_cast %c0_i32_8 : i32 to index
    %c0_16 = arith.constant 0 : index
    %c0_17 = arith.constant 0 : index
    %44 = vector.load %arg6[%43, %c0_16, %c0_17] : memref<4x2x32xf32, #tpu.memory_space<vmem>>, vector<1x2x32xf32>
    %45 = vector.shape_cast %44 : vector<1x2x32xf32> to vector<2x32xf32>
    %46 = vector.shape_cast %42 : vector<2x32xf32> to vector<1x2x32xf32>
    tpu.vector_store %arg6[%43, %c0_16, %c0_17], %46 {strides = array<i32>} : memref<4x2x32xf32, #tpu.memory_space<vmem>>, vector<1x2x32xf32>,
    %c1_i32 = arith.constant 1 : i32
    %47 = arith.index_cast %c1_i32 : i32 to index
    %c0_18 = arith.constant 0 : index
    %c0_19 = arith.constant 0 : index
    %48 = vector.load %arg2[%47, %c0_18, %c0_19] : memref<4x2x128xf32, #tpu.memory_space<vmem>>, vector<1x2x128xf32>
    %49 = vector.shape_cast %48 : vector<1x2x128xf32> to vector<2x128xf32>
    %50 = vector.broadcast %4 : vector<1x128xf32> to vector<2x128xf32>
    %51 = arith.addf %49, %50 : vector<2x128xf32>
    %cst_20 = arith.constant dense<0.000000e+00> : vector<2x128xf32>
    %52 = tpu.matmul %37, %3, %cst_20 {dimension_numbers = #tpu.dot_dimension_numbers<[1], [0], [0], [1], [0, 0, 1, 1], [], []>} : vector<2x32xf32>, vector<32x128xf32>, vector<2x128xf32> -> vector<2x128xf32>
    %53 = arith.addf %51, %52 : vector<2x128xf32>
    %cst_21 = arith.constant 5.000000e-01 : f32
    %54 = vector.broadcast %cst_21 : f32 to vector<2x128xf32>
    %55 = arith.mulf %53, %54 : vector<2x128xf32>
    %56 = arith.select %10, %53, %55 : vector<2x128xi1>, vector<2x128xf32>
    %57 = math.tanh %56 : vector<2x128xf32>
    %cst_22 = arith.constant 5.000000e-01 : f32
    %58 = vector.broadcast %cst_22 : f32 to vector<2x128xf32>
    %59 = arith.mulf %58, %57 : vector<2x128xf32>
    %cst_23 = arith.constant 5.000000e-01 : f32
    %60 = vector.broadcast %cst_23 : f32 to vector<2x128xf32>
    %61 = arith.addf %59, %60 : vector<2x128xf32>
    %62 = arith.select %10, %57, %61 : vector<2x128xi1>, vector<2x128xf32>
    %63 = vector.extract_strided_slice %62 {offsets = [0, 0], sizes = [2, 32], strides = [1, 1]} : vector<2x128xf32> to vector<2x32xf32>
    %64 = vector.extract_strided_slice %62 {offsets = [0, 32], sizes = [2, 32], strides = [1, 1]} : vector<2x128xf32> to vector<2x32xf32>
    %65 = vector.extract_strided_slice %62 {offsets = [0, 64], sizes = [2, 32], strides = [1, 1]} : vector<2x128xf32> to vector<2x32xf32>
    %66 = vector.extract_strided_slice %62 {offsets = [0, 96], sizes = [2, 32], strides = [1, 1]} : vector<2x128xf32> to vector<2x32xf32>
    %67 = arith.mulf %64, %35 : vector<2x32xf32>
    %68 = arith.mulf %63, %65 : vector<2x32xf32>
    %69 = arith.addf %67, %68 : vector<2x32xf32>
    %70 = math.tanh %69 : vector<2x32xf32>
    %71 = arith.mulf %66, %70 : vector<2x32xf32>
    %72 = arith.index_cast %c1_i32 : i32 to index
    %c0_24 = arith.constant 0 : index
    %c0_25 = arith.constant 0 : index
    %73 = vector.load %arg5[%72, %c0_24, %c0_25] : memref<4x2x1xf32, #tpu.memory_space<vmem>>, vector<1x2x1xf32>
    %74 = vector.shape_cast %73 : vector<1x2x1xf32> to vector<2x1xf32>
    %75 = vector.broadcast %74 : vector<2x1xf32> to vector<2x32xf32>
    %76 = arith.mulf %71, %75 : vector<2x32xf32>
    %77 = arith.index_cast %c1_i32 : i32 to index
    %c0_26 = arith.constant 0 : index
    %c0_27 = arith.constant 0 : index
    %78 = vector.load %arg6[%77, %c0_26, %c0_27] : memref<4x2x32xf32, #tpu.memory_space<vmem>>, vector<1x2x32xf32>
    %79 = vector.shape_cast %78 : vector<1x2x32xf32> to vector<2x32xf32>
    %80 = vector.shape_cast %76 : vector<2x32xf32> to vector<1x2x32xf32>
    tpu.vector_store %arg6[%77, %c0_26, %c0_27], %80 {strides = array<i32>} : memref<4x2x32xf32, #tpu.memory_space<vmem>>, vector<1x2x32xf32>,
    %c2_i32 = arith.constant 2 : i32
    %81 = arith.index_cast %c2_i32 : i32 to index
    %c0_28 = arith.constant 0 : index
    %c0_29 = arith.constant 0 : index
    %82 = vector.load %arg2[%81, %c0_28, %c0_29] : memref<4x2x128xf32, #tpu.memory_space<vmem>>, vector<1x2x128xf32>
    %83 = vector.shape_cast %82 : vector<1x2x128xf32> to vector<2x128xf32>
    %84 = vector.broadcast %4 : vector<1x128xf32> to vector<2x128xf32>
    %85 = arith.addf %83, %84 : vector<2x128xf32>
    %cst_30 = arith.constant dense<0.000000e+00> : vector<2x128xf32>
    %86 = tpu.matmul %71, %3, %cst_30 {dimension_numbers = #tpu.dot_dimension_numbers<[1], [0], [0], [1], [0, 0, 1, 1], [], []>} : vector<2x32xf32>, vector<32x128xf32>, vector<2x128xf32> -> vector<2x128xf32>
    %87 = arith.addf %85, %86 : vector<2x128xf32>
    %cst_31 = arith.constant 5.000000e-01 : f32
    %88 = vector.broadcast %cst_31 : f32 to vector<2x128xf32>
    %89 = arith.mulf %87, %88 : vector<2x128xf32>
    %90 = arith.select %10, %87, %89 : vector<2x128xi1>, vector<2x128xf32>
    %91 = math.tanh %90 : vector<2x128xf32>
    %cst_32 = arith.constant 5.000000e-01 : f32
    %92 = vector.broadcast %cst_32 : f32 to vector<2x128xf32>
    %93 = arith.mulf %92, %91 : vector<2x128xf32>
    %cst_33 = arith.constant 5.000000e-01 : f32
    %94 = vector.broadcast %cst_33 : f32 to vector<2x128xf32>
    %95 = arith.addf %93, %94 : vector<2x128xf32>
    %96 = arith.select %10, %91, %95 : vector<2x128xi1>, vector<2x128xf32>
    %97 = vector.extract_strided_slice %96 {offsets = [0, 0], sizes = [2, 32], strides = [1, 1]} : vector<2x128xf32> to vector<2x32xf32>
    %98 = vector.extract_strided_slice %96 {offsets = [0, 32], sizes = [2, 32], strides = [1, 1]} : vector<2x128xf32> to vector<2x32xf32>
    %99 = vector.extract_strided_slice %96 {offsets = [0, 64], sizes = [2, 32], strides = [1, 1]} : vector<2x128xf32> to vector<2x32xf32>
    %100 = vector.extract_strided_slice %96 {offsets = [0, 96], sizes = [2, 32], strides = [1, 1]} : vector<2x128xf32> to vector<2x32xf32>
    %101 = arith.mulf %98, %69 : vector<2x32xf32>
    %102 = arith.mulf %97, %99 : vector<2x32xf32>
    %103 = arith.addf %101, %102 : vector<2x32xf32>
    %104 = math.tanh %103 : vector<2x32xf32>
    %105 = arith.mulf %100, %104 : vector<2x32xf32>
    %106 = arith.index_cast %c2_i32 : i32 to index
    %c0_34 = arith.constant 0 : index
    %c0_35 = arith.constant 0 : index
    %107 = vector.load %arg5[%106, %c0_34, %c0_35] : memref<4x2x1xf32, #tpu.memory_space<vmem>>, vector<1x2x1xf32>
    %108 = vector.shape_cast %107 : vector<1x2x1xf32> to vector<2x1xf32>
    %109 = vector.broadcast %108 : vector<2x1xf32> to vector<2x32xf32>
    %110 = arith.mulf %105, %109 : vector<2x32xf32>
    %111 = arith.index_cast %c2_i32 : i32 to index
    %c0_36 = arith.constant 0 : index
    %c0_37 = arith.constant 0 : index
    %112 = vector.load %arg6[%111, %c0_36, %c0_37] : memref<4x2x32xf32, #tpu.memory_space<vmem>>, vector<1x2x32xf32>
    %113 = vector.shape_cast %112 : vector<1x2x32xf32> to vector<2x32xf32>
    %114 = vector.shape_cast %110 : vector<2x32xf32> to vector<1x2x32xf32>
    tpu.vector_store %arg6[%111, %c0_36, %c0_37], %114 {strides = array<i32>} : memref<4x2x32xf32, #tpu.memory_space<vmem>>, vector<1x2x32xf32>,
    %c3_i32 = arith.constant 3 : i32
    %115 = arith.index_cast %c3_i32 : i32 to index
    %c0_38 = arith.constant 0 : index
    %c0_39 = arith.constant 0 : index
    %116 = vector.load %arg2[%115, %c0_38, %c0_39] : memref<4x2x128xf32, #tpu.memory_space<vmem>>, vector<1x2x128xf32>
    %117 = vector.shape_cast %116 : vector<1x2x128xf32> to vector<2x128xf32>
    %118 = vector.broadcast %4 : vector<1x128xf32> to vector<2x128xf32>
    %119 = arith.addf %117, %118 : vector<2x128xf32>
    %cst_40 = arith.constant dense<0.000000e+00> : vector<2x128xf32>
    %120 = tpu.matmul %105, %3, %cst_40 {dimension_numbers = #tpu.dot_dimension_numbers<[1], [0], [0], [1], [0, 0, 1, 1], [], []>} : vector<2x32xf32>, vector<32x128xf32>, vector<2x128xf32> -> vector<2x128xf32>
    %121 = arith.addf %119, %120 : vector<2x128xf32>
    %cst_41 = arith.constant 5.000000e-01 : f32
    %122 = vector.broadcast %cst_41 : f32 to vector<2x128xf32>
    %123 = arith.mulf %121, %122 : vector<2x128xf32>
    %124 = arith.select %10, %121, %123 : vector<2x128xi1>, vector<2x128xf32>
    %125 = math.tanh %124 : vector<2x128xf32>
    %cst_42 = arith.constant 5.000000e-01 : f32
    %126 = vector.broadcast %cst_42 : f32 to vector<2x128xf32>
    %127 = arith.mulf %126, %125 : vector<2x128xf32>
    %cst_43 = arith.constant 5.000000e-01 : f32
    %128 = vector.broadcast %cst_43 : f32 to vector<2x128xf32>
    %129 = arith.addf %127, %128 : vector<2x128xf32>
    %130 = arith.select %10, %125, %129 : vector<2x128xi1>, vector<2x128xf32>
    %131 = vector.extract_strided_slice %130 {offsets = [0, 0], sizes = [2, 32], strides = [1, 1]} : vector<2x128xf32> to vector<2x32xf32>
    %132 = vector.extract_strided_slice %130 {offsets = [0, 32], sizes = [2, 32], strides = [1, 1]} : vector<2x128xf32> to vector<2x32xf32>
    %133 = vector.extract_strided_slice %130 {offsets = [0, 64], sizes = [2, 32], strides = [1, 1]} : vector<2x128xf32> to vector<2x32xf32>
    %134 = vector.extract_strided_slice %130 {offsets = [0, 96], sizes = [2, 32], strides = [1, 1]} : vector<2x128xf32> to vector<2x32xf32>
    %135 = arith.mulf %132, %103 : vector<2x32xf32>
    %136 = arith.mulf %131, %133 : vector<2x32xf32>
    %137 = arith.addf %135, %136 : vector<2x32xf32>
    %138 = math.tanh %137 : vector<2x32xf32>
    %139 = arith.mulf %134, %138 : vector<2x32xf32>
    %140 = arith.index_cast %c3_i32 : i32 to index
    %c0_44 = arith.constant 0 : index
    %c0_45 = arith.constant 0 : index
    %141 = vector.load %arg5[%140, %c0_44, %c0_45] : memref<4x2x1xf32, #tpu.memory_space<vmem>>, vector<1x2x1xf32>
    %142 = vector.shape_cast %141 : vector<1x2x1xf32> to vector<2x1xf32>
    %143 = vector.broadcast %142 : vector<2x1xf32> to vector<2x32xf32>
    %144 = arith.mulf %139, %143 : vector<2x32xf32>
    %145 = arith.index_cast %c3_i32 : i32 to index
    %c0_46 = arith.constant 0 : index
    %c0_47 = arith.constant 0 : index
    %146 = vector.load %arg6[%145, %c0_46, %c0_47] : memref<4x2x32xf32, #tpu.memory_space<vmem>>, vector<1x2x32xf32>
    %147 = vector.shape_cast %146 : vector<1x2x32xf32> to vector<2x32xf32>
    %148 = vector.shape_cast %144 : vector<2x32xf32> to vector<1x2x32xf32>
    tpu.vector_store %arg6[%145, %c0_46, %c0_47], %148 {strides = array<i32>} : memref<4x2x32xf32, #tpu.memory_space<vmem>>, vector<1x2x32xf32>,
    %c4_i32 = arith.constant 4 : i32
    %c0_48 = arith.constant 0 : index
    %c0_49 = arith.constant 0 : index
    %149 = vector.load %arg7[%c0_48, %c0_49] : memref<2x32xf32, #tpu.memory_space<vmem>>, vector<2x32xf32>
    tpu.vector_store %arg7[%c0_48, %c0_49], %139 {strides = array<i32>} : memref<2x32xf32, #tpu.memory_space<vmem>>, vector<2x32xf32>,
    %c0_50 = arith.constant 0 : index
    %c0_51 = arith.constant 0 : index
    %150 = vector.load %arg8[%c0_50, %c0_51] : memref<2x32xf32, #tpu.memory_space<vmem>>, vector<2x32xf32>
    tpu.vector_store %arg8[%c0_50, %c0_51], %137 {strides = array<i32>} : memref<2x32xf32, #tpu.memory_space<vmem>>, vector<2x32xf32>,
    return
  }
  func.func @transform_0(%arg0: i32, %arg1: i32) -> (i32, i32, i32) {
    %c0_i32 = arith.constant 0 : i32
    %c0_i32_0 = arith.constant 0 : i32
    return %arg1, %arg0, %c0_i32 : i32, i32, i32
  }
  func.func @transform_1(%arg0: i32, %arg1: i32) -> (i32, i32) {
    %c0_i32 = arith.constant 0 : i32
    %c0_i32_0 = arith.constant 0 : i32
    %c0_i32_1 = arith.constant 0 : i32
    return %c0_i32, %c0_i32_0 : i32, i32
  }
  func.func @transform_2(%arg0: i32, %arg1: i32) -> (i32, i32) {
    %c0_i32 = arith.constant 0 : i32
    %c0_i32_0 = arith.constant 0 : i32
    %c0_i32_1 = arith.constant 0 : i32
    return %c0_i32, %c0_i32_0 : i32, i32
  }
  func.func @transform_3(%arg0: i32, %arg1: i32) -> (i32, i32, i32) {
    %c0_i32 = arith.constant 0 : i32
    %c0_i32_0 = arith.constant 0 : i32
    return %arg1, %arg0, %c0_i32 : i32, i32, i32
  }
  func.func @transform_4(%arg0: i32, %arg1: i32) -> (i32, i32, i32) {
    %c0_i32 = arith.constant 0 : i32
    %c0_i32_0 = arith.constant 0 : i32
    return %arg1, %arg0, %c0_i32 : i32, i32, i32
  }
}

</mosaic_0001>

<llo_original>
// kernel: tpu_custom_call.1
$region0: #{tpu_custom_call.1}
  #allocation0 [shape = 'u32[]', space=smem, size = 0x4, offset = 0x4, fixed_abs, tag = 'smem constant byte address 0x4 - core index']
  #allocation1 [shape = 'u32[144,128]{1,0:T(1,128)}', space=vmem, size = 0x12000, scoped, tag = 'internal scratch']
  #allocation2 [shape = 'f32[2,32]{1,0:T(2,128)}', space=vmem, size = 0x400, scoped, tag = 'scratch operand']
  #allocation3 [shape = 'f32[2,32]{1,0:T(2,128)}', space=vmem, size = 0x400, scoped, tag = 'scratch operand']
  %s0 = inlined_call_operand.vmem [shape: f32[8,2,128], index: 0, kind: input, shape index: {}]
  %s1 = inlined_call_operand.hbm [shape: f32[32,128], index: 1, kind: input, shape index: {}]
  %s2 = inlined_call_operand.vmem [shape: f32[1,128], index: 2, kind: input, shape index: {}]
  %s3 = inlined_call_operand.vmem [shape: f32[8,2,1], index: 3, kind: input, shape index: {}]
  %s4 = inlined_call_operand.hbm [shape: f32[8,2,32], index: 4, kind: output, shape index: {}]
  %s5 = sld [smem:[#allocation0]]
  $region57: #{tpu_custom_call.1} parent=0
    _
  %s7 = ssub.s32 1, %s5
  %s8 = scalar_select 0, %s7, %s5
  $region1: #{tpu_custom_call.1} parent=0
    #allocation4 [shape = 'u8[16384]{0}', space=vmem, size = 0x4000, scoped, tag = 'input window, operand 1, single buffered']
    #allocation5 [shape = 's32[2]{0}', space=sflag, size = 0x8, scoped, tag = 'scoped memory for tpu_custom_call.1']
    #allocation6 [shape = 's32[2]{0}', space=sflag, size = 0x8, scoped, tag = 'scoped memory for tpu_custom_call.1']
    #allocation7 [shape = 'u8[8192]{0}', space=vmem, size = 0x2000, scoped, tag = 'output window, operand 0']
    %9 = vsyncpa [#allocation5], 0
    %10 = vsyncpa [#allocation6], 0
    %s11 = scalar_lea.sflag [#allocation6], 1
    %12 = vsyncpa %s11, 0
    loop: start=0, step=1, limit=4
    $region2: #{tpu_custom_call.1} parent=1 // loop_pre_header
      _
    $region3: #{tpu_custom_call.1} parent=1 // loop_header
      %s14 = sphi 0, %s18
      %p15 = scmp.ge.s32.totalorder %s14, 4
      %s21 = sphi 0, %s33
      %s22 = sphi 0, %s29
      %s23 = sphi 0, %s21
      %s24 = sphi 0, %s22
      %s25 = sphi 0, %s23
      %s26 = sphi 0, %s24
      %s38 = sphi 0, %s40
      %s41 = sphi 0, %s38
      %s42 = sphi 0, %s41
      %s58 = sphi 0, %s42
      %s62 = sphi 0, %s62
      %s64 = sphi 0, %s62
      %s65 = sphi 0, %s64
      %s79 = sphi 0, %s65
      %s83 = sphi 0, %s83
      %s85 = sphi 0, %s83
      %s86 = sphi 0, %s85
      %s100 = sphi 0, %s86
      %s108 = sphi 0, %s110
      %s111 = sphi 0, %s108
      %s112 = sphi 0, %s111
      %s128 = sphi 0, %s112
      %s136 = sphi 0, %s138
      %s139 = sphi 0, %s136
      %s140 = sphi 0, %s139
      %s156 = sphi 0, %s140
    $region4: #{tpu_custom_call.1} parent=1 // loop_header_branch
      %17 = sbr.rel (%p15) target = $region8
    $region5: #{tpu_custom_call.1} parent=1 // loop_body
      %s19 = ssub.s32 %s14, 1
      %s20 = ssub.s32 %s14, 2
      %s27 = sadd.s32 1, %s22
      %p28 = scmp.ge.s32.totalorder %s27, 2
      %s29 = scalar_select %p28, 0, %s27
      %s30 = sadd.s32 1, %s21
      %s31 = scalar_select %p28, %s30, %s21
      %p32 = scmp.ge.s32.totalorder %s31, 1
      %s33 = scalar_select %p32, 0, %s31
      %s34 = ssub.s32 %s22, %s29
      %s35 = ssub.s32 %s21, %s33
      %s36 = sor.u32 %s34, %s35
      %p37 = scmp.eq.s32.totalorder %s36, 0
      %s39 = sadd.s32 %s38, 1
      %s40 = scalar_select %p37, %s38, %s39
      %p43 = pneg %p37
      %p44 = scmp.eq.s32.totalorder %s14, 1
      %p45 = por %p43, %p44
      %p46 = scmp.ne.s32.totalorder %s38, %s41
      %p47 = scmp.eq.s32.totalorder %s14, 0
      %p48 = por %p46, %p47
      %p49 = scmp.ne.s32.totalorder %s38, %s41
      %p50 = scmp.eq.s32.totalorder %s19, 1
      %p51 = por %p49, %p50
      %p52 = scmp.ne.s32.totalorder %s41, %s42
      %p53 = scmp.eq.s32.totalorder %s19, 0
      %p54 = por %p52, %p53
      %p55 = scmp.ne.s32.totalorder %s41, %s42
      %p56 = scmp.eq.s32.totalorder %s20, 1
      %p57 = por %p55, %p56
      %p59 = scmp.ne.s32.totalorder %s42, %s58
      %p60 = scmp.eq.s32.totalorder %s20, 0
      %p61 = por %p59, %p60
      %s63 = sadd.s32 %s62, 1
      %p66 = scmp.eq.s32.totalorder %s14, 1
      %p67 = scmp.ne.s32.totalorder %s62, %s64
      %p68 = scmp.eq.s32.totalorder %s14, 0
      %p69 = por %p67, %p68
      %p70 = scmp.ne.s32.totalorder %s62, %s64
      %p71 = scmp.eq.s32.totalorder %s19, 1
      %p72 = por %p70, %p71
      %p73 = scmp.ne.s32.totalorder %s64, %s65
      %p74 = scmp.eq.s32.totalorder %s19, 0
      %p75 = por %p73, %p74
      %p76 = scmp.ne.s32.totalorder %s64, %s65
      %p77 = scmp.eq.s32.totalorder %s20, 1
      %p78 = por %p76, %p77
      %p80 = scmp.ne.s32.totalorder %s65, %s79
      %p81 = scmp.eq.s32.totalorder %s20, 0
      %p82 = por %p80, %p81
      %s84 = sadd.s32 %s83, 1
      %p87 = scmp.eq.s32.totalorder %s14, 1
      %p88 = scmp.ne.s32.totalorder %s83, %s85
      %p89 = scmp.eq.s32.totalorder %s14, 0
      %p90 = por %p88, %p89
      %p91 = scmp.ne.s32.totalorder %s83, %s85
      %p92 = scmp.eq.s32.totalorder %s19, 1
      %p93 = por %p91, %p92
      %p94 = scmp.ne.s32.totalorder %s85, %s86
      %p95 = scmp.eq.s32.totalorder %s19, 0
      %p96 = por %p94, %p95
      %p97 = scmp.ne.s32.totalorder %s85, %s86
      %p98 = scmp.eq.s32.totalorder %s20, 1
      %p99 = por %p97, %p98
      %p101 = scmp.ne.s32.totalorder %s86, %s100
      %p102 = scmp.eq.s32.totalorder %s20, 0
      %p103 = por %p101, %p102
      %s104 = ssub.s32 %s22, %s29
      %s105 = ssub.s32 %s21, %s33
      %s106 = sor.u32 %s104, %s105
      %p107 = scmp.eq.s32.totalorder %s106, 0
      %s109 = sadd.s32 %s108, 1
      %s110 = scalar_select %p107, %s108, %s109
      %p113 = pneg %p107
      %p114 = scmp.eq.s32.totalorder %s14, 1
      %p115 = por %p113, %p114
      %p116 = scmp.ne.s32.totalorder %s108, %s111
      %p117 = scmp.eq.s32.totalorder %s14, 0
      %p118 = por %p116, %p117
      %p119 = scmp.ne.s32.totalorder %s108, %s111
      %p120 = scmp.eq.s32.totalorder %s19, 1
      %p121 = por %p119, %p120
      %p122 = scmp.ne.s32.totalorder %s111, %s112
      %p123 = scmp.eq.s32.totalorder %s19, 0
      %p124 = por %p122, %p123
      %p125 = scmp.ne.s32.totalorder %s111, %s112
      %p126 = scmp.eq.s32.totalorder %s20, 1
      %p127 = por %p125, %p126
      %p129 = scmp.ne.s32.totalorder %s112, %s128
      %p130 = scmp.eq.s32.totalorder %s20, 0
      %p131 = por %p129, %p130
      %s132 = ssub.s32 %s22, %s29
      %s133 = ssub.s32 %s21, %s33
      %s134 = sor.u32 %s132, %s133
      %p135 = scmp.eq.s32.totalorder %s134, 0
      %s137 = sadd.s32 %s136, 1
      %s138 = scalar_select %p135, %s136, %s137
      %p141 = pneg %p135
      %p142 = scmp.eq.s32.totalorder %s14, 1
      %p143 = por %p141, %p142
      %p144 = scmp.ne.s32.totalorder %s136, %s139
      %p145 = scmp.eq.s32.totalorder %s14, 0
      %p146 = por %p144, %p145
      %p147 = scmp.ne.s32.totalorder %s136, %s139
      %p148 = scmp.eq.s32.totalorder %s19, 1
      %p149 = por %p147, %p148
      %p150 = scmp.ne.s32.totalorder %s139, %s140
      %p151 = scmp.eq.s32.totalorder %s19, 0
      %p152 = por %p150, %p151
      %p153 = scmp.ne.s32.totalorder %s139, %s140
      %p154 = scmp.eq.s32.totalorder %s20, 1
      %p155 = por %p153, %p154
      %p157 = scmp.ne.s32.totalorder %s140, %s156
      %p158 = scmp.eq.s32.totalorder %s20, 0
      %p159 = por %p157, %p158
      %p160 = scmp.le.s32.totalorder 1, %s14
      %p161 = scmp.lt.s32.totalorder %s14, 3
      %p162 = pnand %p160, %p161
      %p163 = pneg %p162
      // Predicated region
      $region9: #{tpu_custom_call.1} parent=5 // pred_check
        _
      $region10: #{tpu_custom_call.1} parent=5 // pred_check_branch
        %165 = sbr.rel (%p162) target = $region12
      $region11: #{tpu_custom_call.1} parent=5 // pred_region
        %s166 = ssub.s32 %s14, 1
        // Predicated region
        $region13: #{tpu_custom_call.1} parent=11 // pred_check
          %p167 = pneg %p75
        $region14: #{tpu_custom_call.1} parent=11 // pred_check_branch
          %169 = sbr.rel (%p167) target = $region16
        $region15: #{tpu_custom_call.1} parent=11 // pred_region
          %s171 = ssub.s32 512, 512
          %172 = vsyncadd [#allocation5], %s171
          %s173 = sshll.u32 [#allocation4], 4
          %s174 = int_to_ptr.vmem [resolvable:$true] %s173
          %179 = dma.hbm_to_vmem [thread:$0]  %s1, 512, %s174, [#allocation5], 128, 128, 8
        $region16: #{tpu_custom_call.1} parent=11 // pred_fallthru
          _
        // Predicated region
        $region17: #{tpu_custom_call.1} parent=11 // pred_check
          %p180 = pneg %p96
        $region18: #{tpu_custom_call.1} parent=11 // pred_check_branch
          %182 = sbr.rel (%p180) target = $region20
        $region19: #{tpu_custom_call.1} parent=11 // pred_region
          _
        $region20: #{tpu_custom_call.1} parent=11 // pred_fallthru
          _
      $region12: #{tpu_custom_call.1} parent=5 // pred_fallthru
        _
      %p183 = scmp.lt.s32.totalorder %s14, 2
      // Predicated region
      $region21: #{tpu_custom_call.1} parent=5 // pred_check
        %p184 = pneg %p183
      $region22: #{tpu_custom_call.1} parent=5 // pred_check_branch
        %186 = sbr.rel (%p184) target = $region24
      $region23: #{tpu_custom_call.1} parent=5 // pred_region
        // Predicated region
        $region25: #{tpu_custom_call.1} parent=23 // pred_check
          %p187 = pneg %p48
        $region26: #{tpu_custom_call.1} parent=23 // pred_check_branch
          %189 = sbr.rel (%p187) target = $region28
        $region27: #{tpu_custom_call.1} parent=23 // pred_region
          %s190 = smul.u32 4, %s22
          %p191 = scmp.lt.s32.totalorder %s190, 7
          %s192 = scalar_select %p191, %s190, 7
          %p193 = scmp.lt.s32.totalorder %s21, 0
          %s194 = scalar_select %p193, %s21, 0
          %s195 = sadd.s32 %s194, %s192
          %s196 = smul.addr %s195, 2
          %s197 = scalar_lea.vmem %s0, %s196
          %s198 = smul.u32 4, %s22
        $region28: #{tpu_custom_call.1} parent=23 // pred_fallthru
          _
        // Predicated region
        $region29: #{tpu_custom_call.1} parent=23 // pred_check
          %p199 = pneg %p118
        $region30: #{tpu_custom_call.1} parent=23 // pred_check_branch
          %201 = sbr.rel (%p199) target = $region32
        $region31: #{tpu_custom_call.1} parent=23 // pred_region
          %s202 = smul.u32 4, %s22
          %p203 = scmp.lt.s32.totalorder %s202, 7
          %s204 = scalar_select %p203, %s202, 7
          %p205 = scmp.lt.s32.totalorder %s21, 0
          %s206 = scalar_select %p205, %s21, 0
          %s207 = sadd.s32 %s206, %s204
          %s208 = smul.addr %s207, 2
          %s209 = scalar_lea.vmem %s3, %s208
          %s210 = smul.u32 4, %s22
        $region32: #{tpu_custom_call.1} parent=23 // pred_fallthru
          _
      $region24: #{tpu_custom_call.1} parent=5 // pred_fallthru
        _
      %p211 = scmp.le.s32.totalorder 1, %s14
      %p212 = scmp.lt.s32.totalorder %s14, 3
      %p213 = pnand %p211, %p212
      %p214 = pneg %p213
      // Predicated region
      $region33: #{tpu_custom_call.1} parent=5 // pred_check
        _
      $region34: #{tpu_custom_call.1} parent=5 // pred_check_branch
        %216 = sbr.rel (%p213) target = $region36
      $region35: #{tpu_custom_call.1} parent=5 // pred_region
        %s217 = ssub.s32 %s14, 1
        // Predicated region
        $region37: #{tpu_custom_call.1} parent=35 // pred_check
          %p218 = pneg %p75
        $region38: #{tpu_custom_call.1} parent=35 // pred_check_branch
          %220 = sbr.rel (%p218) target = $region40
        $region39: #{tpu_custom_call.1} parent=35 // pred_region
          %221 = dma.done [#allocation5], 512
        $region40: #{tpu_custom_call.1} parent=35 // pred_fallthru
          _
        %s222 = smul.u32 4, %s24
        %p223 = scmp.lt.s32.totalorder %s222, 7
        %s224 = scalar_select %p223, %s222, 7
        %p225 = scmp.lt.s32.totalorder %s23, 0
        %s226 = scalar_select %p225, %s23, 0
        %s227 = sadd.s32 %s226, %s224
        %s228 = smul.addr %s227, 2
        %s229 = scalar_lea.vmem %s0, %s228
        %p230 = pneg %p54
        %p231 = pneg %p51
        %p232 = pneg %p75
        %p233 = pneg %p72
        %p234 = pneg %p96
        %p235 = pneg %p93
        %s236 = smul.u32 4, %s24
        %p237 = scmp.lt.s32.totalorder %s236, 7
        %s238 = scalar_select %p237, %s236, 7
        %p239 = scmp.lt.s32.totalorder %s23, 0
        %s240 = scalar_select %p239, %s23, 0
        %s241 = sadd.s32 %s240, %s238
        %s242 = smul.addr %s241, 2
        %s243 = scalar_lea.vmem %s3, %s242
        %p244 = pneg %p124
        %p245 = pneg %p121
        %p246 = pneg %p152
        %p247 = pneg %p149
        %s248 = sand.u32 %s139, 1
        %s249 = scalar_lea.sflag [#allocation6], %s248
        %s250 = sand.u32 %s139, 1
        %s251 = smul.addr %s250, 8
        %s252 = scalar_lea.vmem [#allocation7], %s251
        %s253 = smul.u32 4, %s24
        %p254 = scmp.lt.s32.totalorder %s253, 7
        %s255 = scalar_select %p254, %s253, 7
        %p256 = scmp.lt.s32.totalorder %s23, 0
        %s257 = scalar_select %p256, %s23, 0
        %s258 = sadd.s32 %s257, %s255
        %s259 = smul.addr %s258, 2
        %s260 = scalar_lea.vmem %s0, %s259
        %s261 = smul.u32 4, %s24
        %s262 = smul.u32 4, %s24
        %p263 = scmp.lt.s32.totalorder %s262, 7
        %s264 = scalar_select %p263, %s262, 7
        %p265 = scmp.lt.s32.totalorder %s23, 0
        %s266 = scalar_select %p265, %s23, 0
        %s267 = sadd.s32 %s266, %s264
        %s268 = smul.addr %s267, 2
        %s269 = scalar_lea.vmem %s3, %s268
        %s270 = smul.u32 4, %s24
        %s271 = smul.u32 4, %s24
        %p272 = scmp.eq.s32.totalorder %s24, 0
        // Predicated region
        $region41: #{tpu_custom_call.1} parent=35 // pred_check
          %p273 = pneg %p272
        $region42: #{tpu_custom_call.1} parent=35 // pred_check_branch
          %275 = sbr.rel (%p273) target = $region44
        $region43: #{tpu_custom_call.1} parent=35 // pred_region
          %vm276 = vcmask 254976
          %277 = vst.msk [vmem:[#allocation2] sm:$0x3] %vm276, 0.0
          %278 = vst.msk [vmem:[#allocation3] sm:$0x3] %vm276, 0.0
        $region44: #{tpu_custom_call.1} parent=35 // pred_fallthru
          _
        %v279 = vld [vmem:[#allocation4] sm:$0xff]
        %v280 = vld [vmem:[#allocation4 + $0x8] sm:$0xff]
        %v281 = vld [vmem:[#allocation4 + $0x10] sm:$0xff]
        %v282 = vld [vmem:[#allocation4 + $0x18] sm:$0xff]
        %v283 = vld [vmem:[%s2] sm:$0x1]
        %v284 = vlaneseq
        %v285 = vand.u32 %v284, 127
        %vm286 = vcmp.ge.s32.totalorder %v285, 64
        %vm287 = vcmp.lt.s32.totalorder %v285, 96
        %vm288 = vmand %vm286, %vm287
        %v289 = vld [vmem:[#allocation2] sm:$0x3]
        %v290 = vld [vmem:[#allocation3] sm:$0x3]
        %v291 = vld [vmem:[%s260] sm:$0x3]
        %v293 = vlaneseq
        %v294 = vshrl.u32 %v293, 7
        %v295 = vsub.s32 0, %v294
        %v296 = vrot.slane %v283, %v295
        %v298 = vadd.f32 %v291, %v296
        %vm299 = vcmask 261120
        %v301 = vsel %vm299, %v289, 0
        %303 = vmatprep.subr.mxu0 0.0
        %304 = vmatpush1.msra.mxu0 %v279
        %305 = vmatprep.subr.mxu0 0.0
        %306 = vmatpush1.msra.mxu0 %v280
        %307 = vmatprep.subr.mxu0 0.0
        %308 = vmatpush1.msra.mxu0 %v281
        %309 = vmatprep.subr.mxu0 0.0
        %310 = vmatpush1.msra.mxu0 %v282
        %311 = vmatprep.subr.mxu0 0.0
        %312 = vmatpush1.msra.mxu0 0.0
        %313 = vmatprep.subr.mxu0 0.0
        %314 = vmatpush1.msra.mxu0 0.0
        %315 = vmatprep.subr.mxu0 0.0
        %316 = vmatpush1.msra.mxu0 0.0
        %317 = vmatprep.subr.mxu0 0.0
        %318 = vmatpush1.msra.mxu0 0.0
        %319 = vmatprep.subr.mxu0 0.0
        %320 = vmatpush1.msra.mxu0 0.0
        %321 = vmatprep.subr.mxu0 0.0
        %322 = vmatpush1.msra.mxu0 0.0
        %323 = vmatprep.subr.mxu0 0.0
        %324 = vmatpush1.msra.mxu0 0.0
        %325 = vmatprep.subr.mxu0 0.0
        %326 = vmatpush1.msra.mxu0 0.0
        %327 = vmatprep.subr.mxu0 0.0
        %328 = vmatpush1.msra.mxu0 0.0
        %329 = vmatprep.subr.mxu0 0.0
        %330 = vmatpush1.msra.mxu0 0.0
        %331 = vmatprep.subr.mxu0 0.0
        %332 = vmatpush1.msra.mxu0 0.0
        %333 = vmatprep.subr.mxu0 0.0
        %334 = vmatpush1.msra.mxu0 0.0
        %335 = vmatprep.subr.mxu0 0.0
        %336 = vmatpush1.msra.mxu0 0.0
        %337 = vmatprep.subr.mxu0 0.0
        %338 = vmatpush1.msra.mxu0 0.0
        %339 = vmatprep.subr.mxu0 0.0
        %340 = vmatpush1.msra.mxu0 0.0
        %341 = vmatprep.subr.mxu0 0.0
        %342 = vmatpush1.msra.mxu0 0.0
        %343 = vmatprep.subr.mxu0 0.0
        %344 = vmatpush1.msra.mxu0 0.0
        %345 = vmatprep.subr.mxu0 0.0
        %346 = vmatpush1.msra.mxu0 0.0
        %347 = vmatprep.subr.mxu0 0.0
        %348 = vmatpush1.msra.mxu0 0.0
        %349 = vmatprep.subr.mxu0 0.0
        %350 = vmatpush1.msra.mxu0 0.0
        %351 = vmatprep.subr.mxu0 0.0
        %352 = vmatpush1.msra.mxu0 0.0
        %353 = vmatprep.subr.mxu0 0.0
        %354 = vmatpush1.msra.mxu0 0.0
        %355 = vmatprep.subr.mxu0 0.0
        %356 = vmatpush1.msra.mxu0 0.0
        %357 = vmatprep.subr.mxu0 0.0
        %358 = vmatpush1.msra.mxu0 0.0
        %359 = vmatprep.subr.mxu0 0.0
        %360 = vmatpush1.msra.mxu0 0.0
        %361 = vmatprep.subr.mxu0 0.0
        %362 = vmatpush1.msra.mxu0 0.0
        %363 = vmatprep.subr.mxu0 0.0
        %364 = vmatpush1.msra.mxu0 0.0
        %365 = vmatprep.subr.mxu0 0.0
        %366 = vmatpush1.msra.mxu0 0.0
        %367 = vmatprep.mubr.f32.mxu0 0.0
        %368 = vmatmul.mubr.f32.gmra.mrb[0].mxu0 %v301
        %v369 = vpop.f32.mrb[0].mxu0
        %v370 = vadd.f32 0.0, %v369
        %v371 = vpop.f32.mrb[0].mxu0
        %372 = vdwg.mxu0
        %v373 = vadd.f32 %v298, %v370
        %v374 = vmul.f32 %v373, 0.5
        %v375 = vsel %vm288, %v373, %v374
        %v376 = vtanh.pop %v375
        %v377 = vmul.f32 %v376, 0.5
        %v378 = vadd.f32 %v377, 0.5
        %v379 = vsel %vm288, %v376, %v378
        %381 = vrot.lane.b32.xlu0 %v290, 32
        %v382 = vpop.permute.xlu0 %381
        %v384 = vmul.f32 %v379, %v382
        %386 = vrot.lane.b32.xlu0 %v379, 64
        %v387 = vpop.permute.xlu0 %386
        %v389 = vmul.f32 %v379, %v387
        %391 = vrot.lane.b32.xlu0 %v389, 32
        %v392 = vpop.permute.xlu0 %391
        %v394 = vadd.f32 %v384, %v392
        %v395 = vtanh.pop %v394
        %397 = vrot.lane.b32.xlu0 %v395, 64
        %v398 = vpop.permute.xlu0 %397
        %v400 = vmul.f32 %v379, %v398
        %v401 = vld [vmem:[%s269] sm:$0x3]
        %403 = vset.pattern.permute.xlu0 0
        %404 = vperm.xlu0 %403, %v401
        %v405 = vpop.permute.xlu0 %404
        %v407 = vmul.f32 %v400, %v405
        %409 = vrot.lane.b32.xlu0 %v407, 32
        %v410 = vpop.permute.xlu0 %409
        %vm412 = vcmask 254976
        %413 = vst.msk [vmem:[%s252] sm:$0x3] %vm412, %v410
        %s414 = scalar_lea.vmem %s260, 2
        %v415 = vld [vmem:[%s414] sm:$0x3]
        %v416 = vadd.f32 %v415, %v296
        %418 = vrot.lane.b32.xlu0 %v400, 32
        %v419 = vpop.permute.xlu0 %418
        %v420 = vsel %vm299, %v419, 0
        %422 = vmatprep.subr.mxu0 0.0
        %423 = vmatpush1.msra.mxu0 %v279
        %424 = vmatprep.subr.mxu0 0.0
        %425 = vmatpush1.msra.mxu0 %v280
        %426 = vmatprep.subr.mxu0 0.0
        %427 = vmatpush1.msra.mxu0 %v281
        %428 = vmatprep.subr.mxu0 0.0
        %429 = vmatpush1.msra.mxu0 %v282
        %430 = vmatprep.subr.mxu0 0.0
        %431 = vmatpush1.msra.mxu0 0.0
        %432 = vmatprep.subr.mxu0 0.0
        %433 = vmatpush1.msra.mxu0 0.0
        %434 = vmatprep.subr.mxu0 0.0
        %435 = vmatpush1.msra.mxu0 0.0
        %436 = vmatprep.subr.mxu0 0.0
        %437 = vmatpush1.msra.mxu0 0.0
        %438 = vmatprep.subr.mxu0 0.0
        %439 = vmatpush1.msra.mxu0 0.0
        %440 = vmatprep.subr.mxu0 0.0
        %441 = vmatpush1.msra.mxu0 0.0
        %442 = vmatprep.subr.mxu0 0.0
        %443 = vmatpush1.msra.mxu0 0.0
        %444 = vmatprep.subr.mxu0 0.0
        %445 = vmatpush1.msra.mxu0 0.0
        %446 = vmatprep.subr.mxu0 0.0
        %447 = vmatpush1.msra.mxu0 0.0
        %448 = vmatprep.subr.mxu0 0.0
        %449 = vmatpush1.msra.mxu0 0.0
        %450 = vmatprep.subr.mxu0 0.0
        %451 = vmatpush1.msra.mxu0 0.0
        %452 = vmatprep.subr.mxu0 0.0
        %453 = vmatpush1.msra.mxu0 0.0
        %454 = vmatprep.subr.mxu0 0.0
        %455 = vmatpush1.msra.mxu0 0.0
        %456 = vmatprep.subr.mxu0 0.0
        %457 = vmatpush1.msra.mxu0 0.0
        %458 = vmatprep.subr.mxu0 0.0
        %459 = vmatpush1.msra.mxu0 0.0
        %460 = vmatprep.subr.mxu0 0.0
        %461 = vmatpush1.msra.mxu0 0.0
        %462 = vmatprep.subr.mxu0 0.0
        %463 = vmatpush1.msra.mxu0 0.0
        %464 = vmatprep.subr.mxu0 0.0
        %465 = vmatpush1.msra.mxu0 0.0
        %466 = vmatprep.subr.mxu0 0.0
        %467 = vmatpush1.msra.mxu0 0.0
        %468 = vmatprep.subr.mxu0 0.0
        %469 = vmatpush1.msra.mxu0 0.0
        %470 = vmatprep.subr.mxu0 0.0
        %471 = vmatpush1.msra.mxu0 0.0
        %472 = vmatprep.subr.mxu0 0.0
        %473 = vmatpush1.msra.mxu0 0.0
        %474 = vmatprep.subr.mxu0 0.0
        %475 = vmatpush1.msra.mxu0 0.0
        %476 = vmatprep.subr.mxu0 0.0
        %477 = vmatpush1.msra.mxu0 0.0
        %478 = vmatprep.subr.mxu0 0.0
        %479 = vmatpush1.msra.mxu0 0.0
        %480 = vmatprep.subr.mxu0 0.0
        %481 = vmatpush1.msra.mxu0 0.0
        %482 = vmatprep.subr.mxu0 0.0
        %483 = vmatpush1.msra.mxu0 0.0
        %484 = vmatprep.subr.mxu0 0.0
        %485 = vmatpush1.msra.mxu0 0.0
        %486 = vmatprep.mubr.f32.mxu0 0.0
        %487 = vmatmul.mubr.f32.gmra.mrb[0].mxu0 %v420
        %v488 = vpop.f32.mrb[0].mxu0
        %v489 = vadd.f32 0.0, %v488
        %v490 = vpop.f32.mrb[0].mxu0
        %491 = vdwg.mxu0
        %v492 = vadd.f32 %v416, %v489
        %v493 = vmul.f32 %v492, 0.5
        %v494 = vsel %vm288, %v492, %v493
        %v495 = vtanh.pop %v494
        %v496 = vmul.f32 %v495, 0.5
        %v497 = vadd.f32 %v496, 0.5
        %v498 = vsel %vm288, %v495, %v497
        %v499 = vmul.f32 %v498, %v394
        %501 = vrot.lane.b32.xlu0 %v498, 64
        %v502 = vpop.permute.xlu0 %501
        %v504 = vmul.f32 %v498, %v502
        %506 = vrot.lane.b32.xlu0 %v504, 32
        %v507 = vpop.permute.xlu0 %506
        %v509 = vadd.f32 %v499, %v507
        %v510 = vtanh.pop %v509
        %512 = vrot.lane.b32.xlu0 %v510, 64
        %v513 = vpop.permute.xlu0 %512
        %v515 = vmul.f32 %v498, %v513
        %s516 = scalar_lea.vmem %s269, 2
        %v517 = vld [vmem:[%s516] sm:$0x3]
        %519 = vset.pattern.permute.xlu0 0
        %520 = vperm.xlu0 %519, %v517
        %v521 = vpop.permute.xlu0 %520
        %v523 = vmul.f32 %v515, %v521
        %525 = vrot.lane.b32.xlu0 %v523, 32
        %v526 = vpop.permute.xlu0 %525
        %s528 = scalar_lea.vmem %s252, 2 [#allocation7]
        %529 = vst.msk [vmem:[%s528] sm:$0x3] %vm412, %v526
        %s530 = scalar_lea.vmem %s260, 4
        %v531 = vld [vmem:[%s530] sm:$0x3]
        %v532 = vadd.f32 %v531, %v296
        %534 = vrot.lane.b32.xlu0 %v515, 32
        %v535 = vpop.permute.xlu0 %534
        %v536 = vsel %vm299, %v535, 0
        %538 = vmatprep.subr.mxu0 0.0
        %539 = vmatpush1.msra.mxu0 %v279
        %540 = vmatprep.subr.mxu0 0.0
        %541 = vmatpush1.msra.mxu0 %v280
        %542 = vmatprep.subr.mxu0 0.0
        %543 = vmatpush1.msra.mxu0 %v281
        %544 = vmatprep.subr.mxu0 0.0
        %545 = vmatpush1.msra.mxu0 %v282
        %546 = vmatprep.subr.mxu0 0.0
        %547 = vmatpush1.msra.mxu0 0.0
        %548 = vmatprep.subr.mxu0 0.0
        %549 = vmatpush1.msra.mxu0 0.0
        %550 = vmatprep.subr.mxu0 0.0
        %551 = vmatpush1.msra.mxu0 0.0
        %552 = vmatprep.subr.mxu0 0.0
        %553 = vmatpush1.msra.mxu0 0.0
        %554 = vmatprep.subr.mxu0 0.0
        %555 = vmatpush1.msra.mxu0 0.0
        %556 = vmatprep.subr.mxu0 0.0
        %557 = vmatpush1.msra.mxu0 0.0
        %558 = vmatprep.subr.mxu0 0.0
        %559 = vmatpush1.msra.mxu0 0.0
        %560 = vmatprep.subr.mxu0 0.0
        %561 = vmatpush1.msra.mxu0 0.0
        %562 = vmatprep.subr.mxu0 0.0
        %563 = vmatpush1.msra.mxu0 0.0
        %564 = vmatprep.subr.mxu0 0.0
        %565 = vmatpush1.msra.mxu0 0.0
        %566 = vmatprep.subr.mxu0 0.0
        %567 = vmatpush1.msra.mxu0 0.0
        %568 = vmatprep.subr.mxu0 0.0
        %569 = vmatpush1.msra.mxu0 0.0
        %570 = vmatprep.subr.mxu0 0.0
        %571 = vmatpush1.msra.mxu0 0.0
        %572 = vmatprep.subr.mxu0 0.0
        %573 = vmatpush1.msra.mxu0 0.0
        %574 = vmatprep.subr.mxu0 0.0
        %575 = vmatpush1.msra.mxu0 0.0
        %576 = vmatprep.subr.mxu0 0.0
        %577 = vmatpush1.msra.mxu0 0.0
        %578 = vmatprep.subr.mxu0 0.0
        %579 = vmatpush1.msra.mxu0 0.0
        %580 = vmatprep.subr.mxu0 0.0
        %581 = vmatpush1.msra.mxu0 0.0
        %582 = vmatprep.subr.mxu0 0.0
        %583 = vmatpush1.msra.mxu0 0.0
        %584 = vmatprep.subr.mxu0 0.0
        %585 = vmatpush1.msra.mxu0 0.0
        %586 = vmatprep.subr.mxu0 0.0
        %587 = vmatpush1.msra.mxu0 0.0
        %588 = vmatprep.subr.mxu0 0.0
        %589 = vmatpush1.msra.mxu0 0.0
        %590 = vmatprep.subr.mxu0 0.0
        %591 = vmatpush1.msra.mxu0 0.0
        %592 = vmatprep.subr.mxu0 0.0
        %593 = vmatpush1.msra.mxu0 0.0
        %594 = vmatprep.subr.mxu0 0.0
        %595 = vmatpush1.msra.mxu0 0.0
        %596 = vmatprep.subr.mxu0 0.0
        %597 = vmatpush1.msra.mxu0 0.0
        %598 = vmatprep.subr.mxu0 0.0
        %599 = vmatpush1.msra.mxu0 0.0
        %600 = vmatprep.subr.mxu0 0.0
        %601 = vmatpush1.msra.mxu0 0.0
        %602 = vmatprep.mubr.f32.mxu0 0.0
        %603 = vmatmul.mubr.f32.gmra.mrb[0].mxu0 %v536
        %v604 = vpop.f32.mrb[0].mxu0
        %v605 = vadd.f32 0.0, %v604
        %v606 = vpop.f32.mrb[0].mxu0
        %607 = vdwg.mxu0
        %v608 = vadd.f32 %v532, %v605
        %v609 = vmul.f32 %v608, 0.5
        %v610 = vsel %vm288, %v608, %v609
        %v611 = vtanh.pop %v610
        %v612 = vmul.f32 %v611, 0.5
        %v613 = vadd.f32 %v612, 0.5
        %v614 = vsel %vm288, %v611, %v613
        %v615 = vmul.f32 %v614, %v509
        %617 = vrot.lane.b32.xlu0 %v614, 64
        %v618 = vpop.permute.xlu0 %617
        %v620 = vmul.f32 %v614, %v618
        %622 = vrot.lane.b32.xlu0 %v620, 32
        %v623 = vpop.permute.xlu0 %622
        %v625 = vadd.f32 %v615, %v623
        %v626 = vtanh.pop %v625
        %628 = vrot.lane.b32.xlu0 %v626, 64
        %v629 = vpop.permute.xlu0 %628
        %v631 = vmul.f32 %v614, %v629
        %s632 = scalar_lea.vmem %s269, 4
        %v633 = vld [vmem:[%s632] sm:$0x3]
        %635 = vset.pattern.permute.xlu0 0
        %636 = vperm.xlu0 %635, %v633
        %v637 = vpop.permute.xlu0 %636
        %v639 = vmul.f32 %v631, %v637
        %641 = vrot.lane.b32.xlu0 %v639, 32
        %v642 = vpop.permute.xlu0 %641
        %s644 = scalar_lea.vmem %s252, 4 [#allocation7]
        %645 = vst.msk [vmem:[%s644] sm:$0x3] %vm412, %v642
        %s646 = scalar_lea.vmem %s260, 6
        %v647 = vld [vmem:[%s646] sm:$0x3]
        %v648 = vadd.f32 %v647, %v296
        %650 = vrot.lane.b32.xlu0 %v631, 32
        %v651 = vpop.permute.xlu0 %650
        %v652 = vsel %vm299, %v651, 0
        %654 = vmatprep.subr.mxu0 0.0
        %655 = vmatpush1.msra.mxu0 %v279
        %656 = vmatprep.subr.mxu0 0.0
        %657 = vmatpush1.msra.mxu0 %v280
        %658 = vmatprep.subr.mxu0 0.0
        %659 = vmatpush1.msra.mxu0 %v281
        %660 = vmatprep.subr.mxu0 0.0
        %661 = vmatpush1.msra.mxu0 %v282
        %662 = vmatprep.subr.mxu0 0.0
        %663 = vmatpush1.msra.mxu0 0.0
        %664 = vmatprep.subr.mxu0 0.0
        %665 = vmatpush1.msra.mxu0 0.0
        %666 = vmatprep.subr.mxu0 0.0
        %667 = vmatpush1.msra.mxu0 0.0
        %668 = vmatprep.subr.mxu0 0.0
        %669 = vmatpush1.msra.mxu0 0.0
        %670 = vmatprep.subr.mxu0 0.0
        %671 = vmatpush1.msra.mxu0 0.0
        %672 = vmatprep.subr.mxu0 0.0
        %673 = vmatpush1.msra.mxu0 0.0
        %674 = vmatprep.subr.mxu0 0.0
        %675 = vmatpush1.msra.mxu0 0.0
        %676 = vmatprep.subr.mxu0 0.0
        %677 = vmatpush1.msra.mxu0 0.0
        %678 = vmatprep.subr.mxu0 0.0
        %679 = vmatpush1.msra.mxu0 0.0
        %680 = vmatprep.subr.mxu0 0.0
        %681 = vmatpush1.msra.mxu0 0.0
        %682 = vmatprep.subr.mxu0 0.0
        %683 = vmatpush1.msra.mxu0 0.0
        %684 = vmatprep.subr.mxu0 0.0
        %685 = vmatpush1.msra.mxu0 0.0
        %686 = vmatprep.subr.mxu0 0.0
        %687 = vmatpush1.msra.mxu0 0.0
        %688 = vmatprep.subr.mxu0 0.0
        %689 = vmatpush1.msra.mxu0 0.0
        %690 = vmatprep.subr.mxu0 0.0
        %691 = vmatpush1.msra.mxu0 0.0
        %692 = vmatprep.subr.mxu0 0.0
        %693 = vmatpush1.msra.mxu0 0.0
        %694 = vmatprep.subr.mxu0 0.0
        %695 = vmatpush1.msra.mxu0 0.0
        %696 = vmatprep.subr.mxu0 0.0
        %697 = vmatpush1.msra.mxu0 0.0
        %698 = vmatprep.subr.mxu0 0.0
        %699 = vmatpush1.msra.mxu0 0.0
        %700 = vmatprep.subr.mxu0 0.0
        %701 = vmatpush1.msra.mxu0 0.0
        %702 = vmatprep.subr.mxu0 0.0
        %703 = vmatpush1.msra.mxu0 0.0
        %704 = vmatprep.subr.mxu0 0.0
        %705 = vmatpush1.msra.mxu0 0.0
        %706 = vmatprep.subr.mxu0 0.0
        %707 = vmatpush1.msra.mxu0 0.0
        %708 = vmatprep.subr.mxu0 0.0
        %709 = vmatpush1.msra.mxu0 0.0
        %710 = vmatprep.subr.mxu0 0.0
        %711 = vmatpush1.msra.mxu0 0.0
        %712 = vmatprep.subr.mxu0 0.0
        %713 = vmatpush1.msra.mxu0 0.0
        %714 = vmatprep.subr.mxu0 0.0
        %715 = vmatpush1.msra.mxu0 0.0
        %716 = vmatprep.subr.mxu0 0.0
        %717 = vmatpush1.msra.mxu0 0.0
        %718 = vmatprep.mubr.f32.mxu0 0.0
        %719 = vmatmul.mubr.f32.gmra.mrb[0].mxu0 %v652
        %v720 = vpop.f32.mrb[0].mxu0
        %v721 = vadd.f32 0.0, %v720
        %v722 = vpop.f32.mrb[0].mxu0
        %723 = vdwg.mxu0
        %v724 = vadd.f32 %v648, %v721
        %v725 = vmul.f32 %v724, 0.5
        %v726 = vsel %vm288, %v724, %v725
        %v727 = vtanh.pop %v726
        %v728 = vmul.f32 %v727, 0.5
        %v729 = vadd.f32 %v728, 0.5
        %v730 = vsel %vm288, %v727, %v729
        %v731 = vmul.f32 %v730, %v625
        %733 = vrot.lane.b32.xlu0 %v730, 64
        %v734 = vpop.permute.xlu0 %733
        %v736 = vmul.f32 %v730, %v734
        %738 = vrot.lane.b32.xlu0 %v736, 32
        %v739 = vpop.permute.xlu0 %738
        %v741 = vadd.f32 %v731, %v739
        %v742 = vtanh.pop %v741
        %744 = vrot.lane.b32.xlu0 %v742, 64
        %v745 = vpop.permute.xlu0 %744
        %v747 = vmul.f32 %v730, %v745
        %s748 = scalar_lea.vmem %s269, 6
        %v749 = vld [vmem:[%s748] sm:$0x3]
        %751 = vset.pattern.permute.xlu0 0
        %752 = vperm.xlu0 %751, %v749
        %v753 = vpop.permute.xlu0 %752
        %v755 = vmul.f32 %v747, %v753
        %757 = vrot.lane.b32.xlu0 %v755, 32
        %v758 = vpop.permute.xlu0 %757
        %s760 = scalar_lea.vmem %s252, 6 [#allocation7]
        %761 = vst.msk [vmem:[%s760] sm:$0x3] %vm412, %v758
        %763 = vrot.lane.b32.xlu0 %v747, 32
        %v764 = vpop.permute.xlu0 %763
        %766 = vst.msk [vmem:[#allocation2] sm:$0x3] %vm412, %v764
        %768 = vrot.lane.b32.xlu0 %v741, 96
        %v769 = vpop.permute.xlu0 %768
        %771 = vst.msk [vmem:[#allocation3] sm:$0x3] %vm412, %v769
        %s772 = sand.u32 %s139, 1
        %s773 = scalar_lea.sflag [#allocation6], %s772
        %s774 = sand.u32 %s139, 1
        %s775 = smul.addr %s774, 8
        %s776 = scalar_lea.vmem [#allocation7], %s775
        // Predicated region
        $region45: #{tpu_custom_call.1} parent=35 // pred_check
          %p777 = pneg %p149
        $region46: #{tpu_custom_call.1} parent=35 // pred_check_branch
          %779 = sbr.rel (%p777) target = $region48
        $region47: #{tpu_custom_call.1} parent=35 // pred_region
          %s780 = smul.u32 4, %s24
          %s782 = ssub.s32 128, 128
          %783 = vsyncadd %s773, %s782
          %s784 = sadd.s32 %s23, %s780
          %s785 = smul.addr %s784, 32
          %s786 = scalar_lea.hbm %s4, %s785
          %s787 = sshll.u32 %s776, 4
          %s788 = int_to_ptr.vmem [resolvable:$true] %s787
          %793 = dma.vmem_to_hbm [thread:$0]  %s788, 128, %s786, %s773, 32, 32, 2
        $region48: #{tpu_custom_call.1} parent=35 // pred_fallthru
          _
      $region36: #{tpu_custom_call.1} parent=5 // pred_fallthru
        _
      %p794 = scmp.le.s32.totalorder 2, %s14
      // Predicated region
      $region49: #{tpu_custom_call.1} parent=5 // pred_check
        %p795 = pneg %p794
      $region50: #{tpu_custom_call.1} parent=5 // pred_check_branch
        %797 = sbr.rel (%p795) target = $region52
      $region51: #{tpu_custom_call.1} parent=5 // pred_region
        %s798 = ssub.s32 %s14, 2
        // Predicated region
        $region53: #{tpu_custom_call.1} parent=51 // pred_check
          %p799 = pneg %p155
        $region54: #{tpu_custom_call.1} parent=51 // pred_check_branch
          %801 = sbr.rel (%p799) target = $region56
        $region55: #{tpu_custom_call.1} parent=51 // pred_region
          %s802 = sand.u32 %s140, 1
          %s803 = scalar_lea.sflag [#allocation6], %s802
          %s804 = sand.u32 %s140, 1
          %s805 = smul.addr %s804, 8
          %s806 = scalar_lea.vmem [#allocation7], %s805
          %807 = dma.done %s803, 128
        $region56: #{tpu_custom_call.1} parent=51 // pred_fallthru
          _
      $region52: #{tpu_custom_call.1} parent=5 // pred_fallthru
        _
    $region6: #{tpu_custom_call.1} parent=1 // loop_footer
      %s18 = sadd.s32 1, %s14
    $region7: #{tpu_custom_call.1} parent=1 // loop_footer_branch
      %13 = sbr.rel target = $region3
    $region8: #{tpu_custom_call.1} parent=1 // loop_exit
      _
    %808 = vsyncpa [#allocation5], 1
    %s809 = scalar_lea.sflag [#allocation5], 1
    %810 = vsyncpa %s809, 1
    %811 = vsyncpa [#allocation6], 1
    %s812 = scalar_lea.sflag [#allocation6], 1
    %813 = vsyncpa %s812, 1

</llo_original>
